<compile_context>
chip_gen: v7x
topology: tpu7x:2x2x1
jax: 0.10.0
libtpu: 0.0.40
codegen_flags: <defaults>
</compile_context>

<pallas_src>
import jax
import jax.numpy as jnp
from jax.experimental import pallas as pl
from jax.experimental.pallas import tpu as pltpu

_LANE = 128
_SUBLANE = 8


def _sigmoid_affine(x, w, b):
    # sigmoid(w*x + b) via tanh: one EUP transcendental per element, no divide.
    return 0.5 * jnp.tanh(0.5 * (x * w + b)) + 0.5


def _logreg_kernel(x_ref, w_ref, b_ref, o_ref):
    # w/b live in SMEM: scalar reads broadcast for free into the VPU fma.
    w = w_ref[0]
    b = b_ref[0]
    o_ref[...] = _sigmoid_affine(x_ref[...], w, b)


def logistic_regression(x, w, b, *, block_rows=4096, min_pallas_elems=1 << 15):
    """x: (N, 1) f32, w: (1, 1), b: (1,) -> (N, 1) f32 = sigmoid(x @ W^T + b)."""
    N = x.shape[0]
    w_s = w.reshape(1).astype(jnp.float32)
    b_s = b.reshape(1).astype(jnp.float32)

    flat = x.reshape(-1).astype(jnp.float32)
    rows = N // _LANE          # full 128-element lane rows
    rem = N - rows * _LANE     # tail (< 128 elements)

    # Small-N fallback: fixed pallas_call overhead dominates tiny batches.
    if N < min_pallas_elems or rows == 0:
        return _sigmoid_affine(flat, w_s[0], b_s[0]).reshape(N, 1)

    # Block height: multiple of 8 sublanes, no larger than the (rounded-up)
    # row count. rows need NOT be a multiple of br: the final grid block is
    # partial and Pallas masks its out-of-bounds reads/writes.
    br = max(_SUBLANE, -(-block_rows // _SUBLANE) * _SUBLANE)
    br = min(br, -(-rows // _SUBLANE) * _SUBLANE)
    grid = (pl.cdiv(rows, br),)

    # Lane-dense (rows, 128) view of the 128-aligned prefix. When N % 128 == 0
    # this is a free reshape of the whole array (no pad / slice copies).
    x2d = flat[: rows * _LANE].reshape(rows, _LANE)

    cost = pl.CostEstimate(
        flops=2 * rows * _LANE,
        transcendentals=rows * _LANE,
        bytes_accessed=2 * rows * _LANE * 4,
    )

    out2d = pl.pallas_call(
        _logreg_kernel,
        out_shape=jax.ShapeDtypeStruct((rows, _LANE), jnp.float32),
        grid=grid,
        in_specs=[
            pl.BlockSpec((br, _LANE), lambda i: (i, 0)),
            pl.BlockSpec(memory_space=pltpu.MemorySpace.SMEM),
            pl.BlockSpec(memory_space=pltpu.MemorySpace.SMEM),
        ],
        out_specs=pl.BlockSpec((br, _LANE), lambda i: (i, 0)),
        compiler_params=pltpu.CompilerParams(
            dimension_semantics=("parallel",),
        ),
        cost_estimate=cost,
    )(x2d, w_s, b_s)

    out_flat = out2d.reshape(-1)
    if rem:
        # Tiny (<128-element) epilogue instead of padding the whole array.
        tail_out = _sigmoid_affine(flat[rows * _LANE:], w_s[0], b_s[0])
        out_flat = jnp.concatenate([out_flat, tail_out])
    return out_flat.reshape(N, 1)


if __name__ == "__main__":
    key = jax.random.PRNGKey(0)
    kx1, kx2, kw, kb = jax.random.split(key, 4)

    # PyTorch Linear(1, 1): weight (1, 1), bias (1,).
    w = jax.random.normal(kw, (1, 1), dtype=jnp.float32)
    b = jax.random.normal(kb, (1,), dtype=jnp.float32)

    # Case 1: tiny batch -> small-N jnp fallback (pallas overhead would dominate).
    x_small = jax.random.normal(kx1, (8, 1), dtype=jnp.float32)
    out_small = logistic_regression(x_small, w, b)
    jax.block_until_ready(out_small)
    ref_small = jax.nn.sigmoid(x_small @ w.T + b)
    assert out_small.shape == (8, 1)
    assert jnp.allclose(out_small, ref_small, atol=1e-5), (out_small, ref_small)

    # Case 2: exercise the Pallas path on a small, deliberately unaligned batch:
    # 21 lane rows (partial final grid block with block_rows=8) + 5-element tail.
    N = 21 * 128 + 5
    x_big = jax.random.normal(kx2, (N, 1), dtype=jnp.float32)
    out_big = logistic_regression(x_big, w, b, block_rows=8, min_pallas_elems=0)
    jax.block_until_ready(out_big)
    ref_big = jax.nn.sigmoid(x_big @ w.T + b)
    assert out_big.shape == (N, 1)
    assert jnp.allclose(out_big, ref_big, atol=1e-5), (out_big, ref_big)

    print("KERNEL_OK")
</pallas_src>

<mosaic_0001>
module attributes {stable_mosaic.version = 11 : i64} {
  func.func @_logreg_kernel(%arg0: i32, %arg1: memref<8x128xf32, #tpu.memory_space<vmem>>, %arg2: memref<1xf32, #tpu.memory_space<smem>>, %arg3: memref<1xf32, #tpu.memory_space<smem>>, %arg4: memref<8x128xf32, #tpu.memory_space<vmem>>) attributes {dimension_semantics = [#tpu.dimension_semantics<parallel>], iteration_bounds = array<i64: 3>, scalar_prefetch = 0 : i64, scratch_operands = 0 : i64, tpu.core_type = #tpu.core_type<tc>, window_params = [{transform_indices = @transform_0, window_bounds = array<i64: 8, 128>}, {transform_indices = @transform_1, window_bounds = array<i64: 1>}, {transform_indices = @transform_2, window_bounds = array<i64: 1>}, {transform_indices = @transform_3, window_bounds = array<i64: 8, 128>}]} {
    %c0 = arith.constant 0 : index
    %0 = memref.load %arg2[%c0] : memref<1xf32, #tpu.memory_space<smem>>
    %c0_0 = arith.constant 0 : index
    %1 = memref.load %arg3[%c0_0] : memref<1xf32, #tpu.memory_space<smem>>
    %c0_1 = arith.constant 0 : index
    %c0_2 = arith.constant 0 : index
    %2 = vector.load %arg1[%c0_1, %c0_2] : memref<8x128xf32, #tpu.memory_space<vmem>>, vector<8x128xf32>
    %3 = vector.broadcast %0 : f32 to vector<8x128xf32>
    %4 = arith.mulf %2, %3 : vector<8x128xf32>
    %5 = vector.broadcast %1 : f32 to vector<8x128xf32>
    %6 = arith.addf %4, %5 : vector<8x128xf32>
    %cst = arith.constant 5.000000e-01 : f32
    %7 = vector.broadcast %cst : f32 to vector<8x128xf32>
    %8 = arith.mulf %7, %6 : vector<8x128xf32>
    %9 = math.tanh %8 : vector<8x128xf32>
    %cst_3 = arith.constant 5.000000e-01 : f32
    %10 = vector.broadcast %cst_3 : f32 to vector<8x128xf32>
    %11 = arith.mulf %10, %9 : vector<8x128xf32>
    %cst_4 = arith.constant 5.000000e-01 : f32
    %12 = vector.broadcast %cst_4 : f32 to vector<8x128xf32>
    %13 = arith.addf %11, %12 : vector<8x128xf32>
    %c0_5 = arith.constant 0 : index
    %c0_6 = arith.constant 0 : index
    %14 = vector.load %arg4[%c0_5, %c0_6] : memref<8x128xf32, #tpu.memory_space<vmem>>, vector<8x128xf32>
    tpu.vector_store %arg4[%c0_5, %c0_6], %13 {strides = array<i32>} : memref<8x128xf32, #tpu.memory_space<vmem>>, vector<8x128xf32>,
    return
  }
  func.func @transform_0(%arg0: i32) -> (i32, i32) {
    %c0_i32 = arith.constant 0 : i32
    %c0_i32_0 = arith.constant 0 : i32
    return %arg0, %c0_i32 : i32, i32
  }
  func.func @transform_1(%arg0: i32) -> i32 {
    %c0_i32 = arith.constant 0 : i32
    %c0_i32_0 = arith.constant 0 : i32
    return %c0_i32 : i32
  }
  func.func @transform_2(%arg0: i32) -> i32 {
    %c0_i32 = arith.constant 0 : i32
    %c0_i32_0 = arith.constant 0 : i32
    return %c0_i32 : i32
  }
  func.func @transform_3(%arg0: i32) -> (i32, i32) {
    %c0_i32 = arith.constant 0 : i32
    %c0_i32_0 = arith.constant 0 : i32
    return %arg0, %c0_i32 : i32, i32
  }
}

</mosaic_0001>

<llo_original>
// kernel: tpu_custom_call.1
$region0: #{tpu_custom_call.1}
  #allocation0 [shape = 'u32[]', space=smem, size = 0x4, offset = 0x4, fixed_abs, tag = 'smem constant byte address 0x4 - core index']
  #allocation1 [shape = 'u32[144,128]{1,0:T(1,128)}', space=vmem, size = 0x12000, scoped, tag = 'internal scratch']
  #allocation2 [shape = 'f32[1]{0:T(128)S(6)}', space=smem, size = 0x200, scoped, tag = 'scoped memory for tpu_custom_call.1']
  #allocation3 [shape = 'f32[1]{0:T(128)S(6)}', space=smem, size = 0x200, scoped, tag = 'scoped memory for tpu_custom_call.1']
  %s0 = inlined_call_operand.hbm [shape: f32[21,128], index: 0, kind: input, shape index: {}]
  %s1 = inlined_call_operand.<no memory space> [shape: f32[1], index: 1, kind: input, shape index: {}]
  %s2 = inlined_call_operand.<no memory space> [shape: f32[1], index: 2, kind: input, shape index: {}]
  %s3 = inlined_call_operand.hbm [shape: f32[21,128], index: 3, kind: output, shape index: {}]
  %s4 = sld [smem:[#allocation0]]
  $region49: #{tpu_custom_call.1} parent=0
    _
  %s6 = ssub.s32 1, %s4
  %s7 = scalar_select 0, %s6, %s4
  %8 = sst [smem:[#allocation2]] %s1
  %9 = sst [smem:[#allocation3]] %s2
  $region1: #{tpu_custom_call.1} parent=0
    #allocation4 [shape = 'u8[8192]{0}', space=vmem, size = 0x2000, scoped, tag = 'input window, operand 0']
    #allocation5 [shape = 's32[2]{0}', space=sflag, size = 0x8, scoped, tag = 'scoped memory for tpu_custom_call.1']
    #allocation6 [shape = 's32[2]{0}', space=sflag, size = 0x8, scoped, tag = 'scoped memory for tpu_custom_call.1']
    #allocation7 [shape = 'u8[8192]{0}', space=vmem, size = 0x2000, scoped, tag = 'output window, operand 0']
    %10 = vsyncpa [#allocation5], 0
    %s11 = scalar_lea.sflag [#allocation5], 1
    %12 = vsyncpa %s11, 0
    %13 = vsyncpa [#allocation6], 0
    %s14 = scalar_lea.sflag [#allocation6], 1
    %15 = vsyncpa %s14, 0
    loop: start=0, step=1, limit=5
    $region2: #{tpu_custom_call.1} parent=1 // loop_pre_header
      _
    $region3: #{tpu_custom_call.1} parent=1 // loop_header
      %s17 = sphi 0, %s21
      %p18 = scmp.ge.s32.totalorder %s17, 5
      %s27 = sphi 0, %s29
      %s30 = sphi 0, %s27
      %s31 = sphi 0, %s30
      %s47 = sphi 0, %s31
      %s51 = sphi 0, %s51
      %s53 = sphi 0, %s51
      %s54 = sphi 0, %s53
      %s68 = sphi 0, %s54
      %s72 = sphi 0, %s72
      %s74 = sphi 0, %s72
      %s75 = sphi 0, %s74
      %s89 = sphi 0, %s75
      %s95 = sphi 0, %s97
      %s98 = sphi 0, %s95
      %s99 = sphi 0, %s98
      %s115 = sphi 0, %s99
    $region4: #{tpu_custom_call.1} parent=1 // loop_header_branch
      %20 = sbr.rel (%p18) target = $region8
    $region5: #{tpu_custom_call.1} parent=1 // loop_body
      %s22 = ssub.s32 %s17, 1
      %s23 = ssub.s32 %s17, 2
      %s24 = sadd.s32 %s17, 1
      %s25 = ssub.s32 %s17, %s24
      %p26 = scmp.eq.s32.totalorder %s25, 0
      %s28 = sadd.s32 %s27, 1
      %s29 = scalar_select %p26, %s27, %s28
      %p32 = pneg %p26
      %p33 = scmp.eq.s32.totalorder %s17, 2
      %p34 = por %p32, %p33
      %p35 = scmp.ne.s32.totalorder %s27, %s30
      %p36 = scmp.eq.s32.totalorder %s17, 0
      %p37 = por %p35, %p36
      %p38 = scmp.ne.s32.totalorder %s27, %s30
      %p39 = scmp.eq.s32.totalorder %s22, 2
      %p40 = por %p38, %p39
      %p41 = scmp.ne.s32.totalorder %s30, %s31
      %p42 = scmp.eq.s32.totalorder %s22, 0
      %p43 = por %p41, %p42
      %p44 = scmp.ne.s32.totalorder %s30, %s31
      %p45 = scmp.eq.s32.totalorder %s23, 2
      %p46 = por %p44, %p45
      %p48 = scmp.ne.s32.totalorder %s31, %s47
      %p49 = scmp.eq.s32.totalorder %s23, 0
      %p50 = por %p48, %p49
      %s52 = sadd.s32 %s51, 1
      %p55 = scmp.eq.s32.totalorder %s17, 2
      %p56 = scmp.ne.s32.totalorder %s51, %s53
      %p57 = scmp.eq.s32.totalorder %s17, 0
      %p58 = por %p56, %p57
      %p59 = scmp.ne.s32.totalorder %s51, %s53
      %p60 = scmp.eq.s32.totalorder %s22, 2
      %p61 = por %p59, %p60
      %p62 = scmp.ne.s32.totalorder %s53, %s54
      %p63 = scmp.eq.s32.totalorder %s22, 0
      %p64 = por %p62, %p63
      %p65 = scmp.ne.s32.totalorder %s53, %s54
      %p66 = scmp.eq.s32.totalorder %s23, 2
      %p67 = por %p65, %p66
      %p69 = scmp.ne.s32.totalorder %s54, %s68
      %p70 = scmp.eq.s32.totalorder %s23, 0
      %p71 = por %p69, %p70
      %s73 = sadd.s32 %s72, 1
      %p76 = scmp.eq.s32.totalorder %s17, 2
      %p77 = scmp.ne.s32.totalorder %s72, %s74
      %p78 = scmp.eq.s32.totalorder %s17, 0
      %p79 = por %p77, %p78
      %p80 = scmp.ne.s32.totalorder %s72, %s74
      %p81 = scmp.eq.s32.totalorder %s22, 2
      %p82 = por %p80, %p81
      %p83 = scmp.ne.s32.totalorder %s74, %s75
      %p84 = scmp.eq.s32.totalorder %s22, 0
      %p85 = por %p83, %p84
      %p86 = scmp.ne.s32.totalorder %s74, %s75
      %p87 = scmp.eq.s32.totalorder %s23, 2
      %p88 = por %p86, %p87
      %p90 = scmp.ne.s32.totalorder %s75, %s89
      %p91 = scmp.eq.s32.totalorder %s23, 0
      %p92 = por %p90, %p91
      %s93 = ssub.s32 %s17, %s24
      %p94 = scmp.eq.s32.totalorder %s93, 0
      %s96 = sadd.s32 %s95, 1
      %s97 = scalar_select %p94, %s95, %s96
      %p100 = pneg %p94
      %p101 = scmp.eq.s32.totalorder %s17, 2
      %p102 = por %p100, %p101
      %p103 = scmp.ne.s32.totalorder %s95, %s98
      %p104 = scmp.eq.s32.totalorder %s17, 0
      %p105 = por %p103, %p104
      %p106 = scmp.ne.s32.totalorder %s95, %s98
      %p107 = scmp.eq.s32.totalorder %s22, 2
      %p108 = por %p106, %p107
      %p109 = scmp.ne.s32.totalorder %s98, %s99
      %p110 = scmp.eq.s32.totalorder %s22, 0
      %p111 = por %p109, %p110
      %p112 = scmp.ne.s32.totalorder %s98, %s99
      %p113 = scmp.eq.s32.totalorder %s23, 2
      %p114 = por %p112, %p113
      %p116 = scmp.ne.s32.totalorder %s99, %s115
      %p117 = scmp.eq.s32.totalorder %s23, 0
      %p118 = por %p116, %p117
      %p119 = scmp.le.s32.totalorder 1, %s17
      %p120 = scmp.lt.s32.totalorder %s17, 4
      %p121 = pnand %p119, %p120
      %p122 = pneg %p121
      // Predicated region
      $region9: #{tpu_custom_call.1} parent=5 // pred_check
        _
      $region10: #{tpu_custom_call.1} parent=5 // pred_check_branch
        %124 = sbr.rel (%p121) target = $region12
      $region11: #{tpu_custom_call.1} parent=5 // pred_region
        %s125 = ssub.s32 %s17, 1
        // Predicated region
        $region13: #{tpu_custom_call.1} parent=11 // pred_check
          %p126 = pneg %p64
        $region14: #{tpu_custom_call.1} parent=11 // pred_check_branch
          %128 = sbr.rel (%p126) target = $region16
        $region15: #{tpu_custom_call.1} parent=11 // pred_region
          _
        $region16: #{tpu_custom_call.1} parent=11 // pred_fallthru
          _
        // Predicated region
        $region17: #{tpu_custom_call.1} parent=11 // pred_check
          %p129 = pneg %p85
        $region18: #{tpu_custom_call.1} parent=11 // pred_check_branch
          %131 = sbr.rel (%p129) target = $region20
        $region19: #{tpu_custom_call.1} parent=11 // pred_region
          _
        $region20: #{tpu_custom_call.1} parent=11 // pred_fallthru
          _
      $region12: #{tpu_custom_call.1} parent=5 // pred_fallthru
        _
      %p132 = scmp.lt.s32.totalorder %s17, 3
      // Predicated region
      $region21: #{tpu_custom_call.1} parent=5 // pred_check
        %p133 = pneg %p132
      $region22: #{tpu_custom_call.1} parent=5 // pred_check_branch
        %135 = sbr.rel (%p133) target = $region24
      $region23: #{tpu_custom_call.1} parent=5 // pred_region
        // Predicated region
        $region25: #{tpu_custom_call.1} parent=23 // pred_check
          %p136 = pneg %p37
        $region26: #{tpu_custom_call.1} parent=23 // pred_check_branch
          %138 = sbr.rel (%p136) target = $region28
        $region27: #{tpu_custom_call.1} parent=23 // pred_region
          %s139 = sand.u32 %s27, 1
          %s140 = scalar_lea.sflag [#allocation5], %s139
          %s141 = sand.u32 %s27, 1
          %s142 = smul.addr %s141, 8
          %s143 = scalar_lea.vmem [#allocation4], %s142
          %s145 = ssub.s32 128, 128
          %146 = vsyncadd %s140, %s145
          %s147 = smul.addr %s17, 128
          %s148 = scalar_lea.hbm %s0, %s147
          %s150 = sshll.u32 %s143, 4
          %s151 = int_to_ptr.vmem [resolvable:$true] %s150
          %153 = dma.hbm_to_vmem [thread:$0]  %s148, 128, %s151, %s140
        $region28: #{tpu_custom_call.1} parent=23 // pred_fallthru
          _
      $region24: #{tpu_custom_call.1} parent=5 // pred_fallthru
        _
      %p154 = scmp.le.s32.totalorder 1, %s17
      %p155 = scmp.lt.s32.totalorder %s17, 4
      %p156 = pnand %p154, %p155
      %p157 = pneg %p156
      // Predicated region
      $region29: #{tpu_custom_call.1} parent=5 // pred_check
        _
      $region30: #{tpu_custom_call.1} parent=5 // pred_check_branch
        %159 = sbr.rel (%p156) target = $region32
      $region31: #{tpu_custom_call.1} parent=5 // pred_region
        %s160 = ssub.s32 %s17, 1
        %s161 = sand.u32 %s30, 1
        %s162 = scalar_lea.sflag [#allocation5], %s161
        %s163 = sand.u32 %s30, 1
        %s164 = smul.addr %s163, 8
        %s165 = scalar_lea.vmem [#allocation4], %s164
        // Predicated region
        $region33: #{tpu_custom_call.1} parent=31 // pred_check
          %p166 = pneg %p43
        $region34: #{tpu_custom_call.1} parent=31 // pred_check_branch
          %168 = sbr.rel (%p166) target = $region36
        $region35: #{tpu_custom_call.1} parent=31 // pred_region
          %169 = dma.done %s162, 128
        $region36: #{tpu_custom_call.1} parent=31 // pred_fallthru
          _
        %s170 = sand.u32 %s30, 1
        %s171 = scalar_lea.sflag [#allocation5], %s170
        %s172 = sand.u32 %s30, 1
        %s173 = smul.addr %s172, 8
        %s174 = scalar_lea.vmem [#allocation4], %s173
        %p175 = pneg %p43
        %p176 = pneg %p40
        %p177 = pneg %p64
        %p178 = pneg %p61
        %p179 = pneg %p85
        %p180 = pneg %p82
        %p181 = pneg %p111
        %p182 = pneg %p108
        %s183 = sand.u32 %s98, 1
        %s184 = scalar_lea.sflag [#allocation6], %s183
        %s185 = sand.u32 %s98, 1
        %s186 = smul.addr %s185, 8
        %s187 = scalar_lea.vmem [#allocation7], %s186
        %s188 = sld [smem:[#allocation2]]
        %s189 = sld [smem:[#allocation3]]
        %v190 = vld [vmem:[%s165] sm:$0xff]
        %v191 = vstv %s188
        %v192 = vmul.f32 %v190, %v191
        %v193 = vstv %s189
        %v194 = vadd.f32 %v192, %v193
        %v195 = vmul.f32 %v194, 0.5
        %v196 = vtanh.pop %v195
        %v197 = vmul.f32 %v196, 0.5
        %v198 = vadd.f32 %v197, 0.5
        %199 = vst [vmem:[%s187] sm:$0xff] %v198
        %s200 = sand.u32 %s98, 1
        %s201 = scalar_lea.sflag [#allocation6], %s200
        %s202 = sand.u32 %s98, 1
        %s203 = smul.addr %s202, 8
        %s204 = scalar_lea.vmem [#allocation7], %s203
        // Predicated region
        $region37: #{tpu_custom_call.1} parent=31 // pred_check
          %p205 = pneg %p108
        $region38: #{tpu_custom_call.1} parent=31 // pred_check_branch
          %207 = sbr.rel (%p205) target = $region40
        $region39: #{tpu_custom_call.1} parent=31 // pred_region
          %s209 = ssub.s32 128, 128
          %210 = vsyncadd %s201, %s209
          %s211 = smul.addr %s22, 128
          %s212 = scalar_lea.hbm %s3, %s211
          %s214 = sshll.u32 %s204, 4
          %s215 = int_to_ptr.vmem [resolvable:$true] %s214
          %217 = dma.vmem_to_hbm [thread:$0]  %s215, 128, %s212, %s201
        $region40: #{tpu_custom_call.1} parent=31 // pred_fallthru
          _
      $region32: #{tpu_custom_call.1} parent=5 // pred_fallthru
        _
      %p218 = scmp.le.s32.totalorder 2, %s17
      // Predicated region
      $region41: #{tpu_custom_call.1} parent=5 // pred_check
        %p219 = pneg %p218
      $region42: #{tpu_custom_call.1} parent=5 // pred_check_branch
        %221 = sbr.rel (%p219) target = $region44
      $region43: #{tpu_custom_call.1} parent=5 // pred_region
        %s222 = ssub.s32 %s17, 2
        // Predicated region
        $region45: #{tpu_custom_call.1} parent=43 // pred_check
          %p223 = pneg %p114
        $region46: #{tpu_custom_call.1} parent=43 // pred_check_branch
          %225 = sbr.rel (%p223) target = $region48
        $region47: #{tpu_custom_call.1} parent=43 // pred_region
          %s226 = sand.u32 %s99, 1
          %s227 = scalar_lea.sflag [#allocation6], %s226
          %s228 = sand.u32 %s99, 1
          %s229 = smul.addr %s228, 8
          %s230 = scalar_lea.vmem [#allocation7], %s229
          %231 = dma.done %s227, 128
        $region48: #{tpu_custom_call.1} parent=43 // pred_fallthru
          _
      $region44: #{tpu_custom_call.1} parent=5 // pred_fallthru
        _
    $region6: #{tpu_custom_call.1} parent=1 // loop_footer
      %s21 = sadd.s32 1, %s17
    $region7: #{tpu_custom_call.1} parent=1 // loop_footer_branch
      %16 = sbr.rel target = $region3
    $region8: #{tpu_custom_call.1} parent=1 // loop_exit
      _
    %232 = vsyncpa [#allocation5], 1
    %s233 = scalar_lea.sflag [#allocation5], 1
    %234 = vsyncpa %s233, 1
    %235 = vsyncpa [#allocation6], 1
    %s236 = scalar_lea.sflag [#allocation6], 1
    %237 = vsyncpa %s236, 1

</llo_original>
